<compile_context>
chip_gen: v7x
topology: tpu7x:2x2x1
jax: 0.10.0
libtpu: 0.0.40
codegen_flags: <defaults>
</compile_context>

<pallas_src>
import functools

import jax
import jax.numpy as jnp
from jax import lax
from jax.experimental import pallas as pl
from jax.experimental.pallas import tpu as pltpu


def _round_up(x: int, m: int) -> int:
    return ((x + m - 1) // m) * m


def _lm_head_kernel(x_ref, w_ref, b_ref, o_ref):
    """o = x @ w.T + b  for one (tm, D) row-tile.

    x_ref : (tm, D) input rows in VMEM (streamed)
    w_ref : (D, D)  weight in PyTorch (out, in) layout, VMEM-resident
    b_ref : (1, D)  bias, VMEM-resident
    o_ref : (tm, D) output rows in VMEM
    """
    # Contract x's last dim with w's last dim  ==  x @ W.T  (no explicit
    # transpose materialized; MXU handles the operand layout).
    y = lax.dot_general(
        x_ref[...], w_ref[...],
        dimension_numbers=(((1,), (1,)), ((), ())),
        preferred_element_type=jnp.float32,
    )
    y = y + b_ref[...].astype(jnp.float32)
    o_ref[...] = y.astype(o_ref.dtype)


@functools.partial(jax.jit, static_argnames=("block_rows",))
def lm_head(hidden_states: jnp.ndarray,
            weight: jnp.ndarray,
            bias: jnp.ndarray,
            *,
            block_rows: int = 1024) -> jnp.ndarray:
    """Pallas implementation of nn.Linear(d_model, d_model) applied to the
    last axis of `hidden_states`.

    hidden_states : (..., D)
    weight        : (D, D)   -- PyTorch layout (out_features, in_features)
    bias          : (D,)
    """
    *lead, D = hidden_states.shape
    x2d = hidden_states.reshape(-1, D)                    # (M, D)
    M = x2d.shape[0]

    # Row-tile size: multiple of 8 (sublane), capped by block_rows.
    tm = min(block_rows, _round_up(M, 8))
    m_pad = _round_up(M, tm)
    if m_pad != M:
        x2d = jnp.pad(x2d, ((0, m_pad - M), (0, 0)))

    b2d = bias.reshape(1, D)

    out = pl.pallas_call(
        _lm_head_kernel,
        out_shape=jax.ShapeDtypeStruct((m_pad, D), hidden_states.dtype),
        grid_spec=pltpu.PrefetchScalarGridSpec(
            num_scalar_prefetch=0,
            grid=(m_pad // tm,),
            in_specs=[
                pl.BlockSpec((tm, D), lambda i: (i, 0)),   # streamed row tiles
                pl.BlockSpec((D, D), lambda i: (0, 0)),    # weight: VMEM-resident
                pl.BlockSpec((1, D), lambda i: (0, 0)),    # bias:   VMEM-resident
            ],
            out_specs=pl.BlockSpec((tm, D), lambda i: (i, 0)),
        ),
        compiler_params=pltpu.CompilerParams(
            dimension_semantics=("parallel",),             # megacore on v7x
        ),
    )(x2d, weight, b2d)

    if m_pad != M:
        out = out[:M]
    return out.reshape(*lead, D)


if __name__ == "__main__":
    d_model = 8
    batch = 2
    seq = 64

    key = jax.random.PRNGKey(0)
    k_x, k_w, k_b = jax.random.split(key, 3)

    hidden_states = jax.random.normal(k_x, (batch, seq, d_model), dtype=jnp.float32)
    # PyTorch nn.Linear parameter layout: weight (out, in), bias (out,)
    weight = jax.random.normal(k_w, (d_model, d_model), dtype=jnp.float32) * 0.1
    bias = jax.random.normal(k_b, (d_model,), dtype=jnp.float32) * 0.1

    # block_rows=32 -> grid=(4,) so the row-tiled pipeline is actually exercised.
    logits = lm_head(hidden_states, weight, bias, block_rows=32)
    logits = jax.block_until_ready(logits)

    assert logits.shape == (batch, seq, d_model)
    assert logits.dtype == hidden_states.dtype

    # Reference: y = x @ W.T + b
    ref = jnp.einsum("bsd,od->bso", hidden_states, weight) + bias
    assert bool(jnp.all(jnp.abs(logits - ref) < 1e-4)), "mismatch vs reference"

    print("KERNEL_OK")
</pallas_src>

<mosaic_0001>
module attributes {stable_mosaic.version = 11 : i64} {
  func.func @_lm_head_kernel(%arg0: i32, %arg1: memref<32x8xf32, #tpu.memory_space<vmem>>, %arg2: memref<8x8xf32, #tpu.memory_space<vmem>>, %arg3: memref<1x8xf32, #tpu.memory_space<vmem>>, %arg4: memref<32x8xf32, #tpu.memory_space<vmem>>) attributes {dimension_semantics = [#tpu.dimension_semantics<parallel>], iteration_bounds = array<i64: 4>, scalar_prefetch = 0 : i64, scratch_operands = 0 : i64, tpu.core_type = #tpu.core_type<tc>, window_params = [{transform_indices = @transform_0, window_bounds = array<i64: 32, 8>}, {pipeline_mode = #tpu.pipeline_mode<synchronous>, transform_indices = @transform_1, window_bounds = array<i64: 8, 8>}, {pipeline_mode = #tpu.pipeline_mode<synchronous>, transform_indices = @transform_2, window_bounds = array<i64: 1, 8>}, {transform_indices = @transform_3, window_bounds = array<i64: 32, 8>}]} {
    %c0 = arith.constant 0 : index
    %c0_0 = arith.constant 0 : index
    %0 = vector.load %arg1[%c0, %c0_0] : memref<32x8xf32, #tpu.memory_space<vmem>>, vector<32x8xf32>
    %c0_1 = arith.constant 0 : index
    %c0_2 = arith.constant 0 : index
    %1 = vector.load %arg2[%c0_1, %c0_2] : memref<8x8xf32, #tpu.memory_space<vmem>>, vector<8x8xf32>
    %cst = arith.constant dense<0.000000e+00> : vector<32x8xf32>
    %2 = tpu.matmul %0, %1, %cst {dimension_numbers = #tpu.dot_dimension_numbers<[1], [1], [0], [0], [0, 0, 1, 0], [], []>} : vector<32x8xf32>, vector<8x8xf32>, vector<32x8xf32> -> vector<32x8xf32>
    %c0_3 = arith.constant 0 : index
    %c0_4 = arith.constant 0 : index
    %3 = vector.load %arg3[%c0_3, %c0_4] : memref<1x8xf32, #tpu.memory_space<vmem>>, vector<1x8xf32>
    %4 = vector.broadcast %3 : vector<1x8xf32> to vector<32x8xf32>
    %5 = arith.addf %2, %4 : vector<32x8xf32>
    %c0_5 = arith.constant 0 : index
    %c0_6 = arith.constant 0 : index
    %6 = vector.load %arg4[%c0_5, %c0_6] : memref<32x8xf32, #tpu.memory_space<vmem>>, vector<32x8xf32>
    tpu.vector_store %arg4[%c0_5, %c0_6], %5 {strides = array<i32>} : memref<32x8xf32, #tpu.memory_space<vmem>>, vector<32x8xf32>,
    return
  }
  func.func @transform_0(%arg0: i32) -> (i32, i32) {
    %c0_i32 = arith.constant 0 : i32
    %c0_i32_0 = arith.constant 0 : i32
    return %arg0, %c0_i32 : i32, i32
  }
  func.func @transform_1(%arg0: i32) -> (i32, i32) {
    %c0_i32 = arith.constant 0 : i32
    %c0_i32_0 = arith.constant 0 : i32
    %c0_i32_1 = arith.constant 0 : i32
    return %c0_i32, %c0_i32_0 : i32, i32
  }
  func.func @transform_2(%arg0: i32) -> (i32, i32) {
    %c0_i32 = arith.constant 0 : i32
    %c0_i32_0 = arith.constant 0 : i32
    %c0_i32_1 = arith.constant 0 : i32
    return %c0_i32, %c0_i32_0 : i32, i32
  }
  func.func @transform_3(%arg0: i32) -> (i32, i32) {
    %c0_i32 = arith.constant 0 : i32
    %c0_i32_0 = arith.constant 0 : i32
    return %arg0, %c0_i32 : i32, i32
  }
}

</mosaic_0001>

<llo_original>
// kernel: lm_head.1
$region0: #{lm_head.1}
  #allocation0 [shape = 'u32[]', space=smem, size = 0x4, offset = 0x4, fixed_abs, tag = 'smem constant byte address 0x4 - core index']
  #allocation1 [shape = 'u32[144,128]{1,0:T(1,128)}', space=vmem, size = 0x12000, scoped, tag = 'internal scratch']
  %s0 = inlined_call_operand.vmem [shape: f32[128,8], index: 0, kind: input, shape index: {}]
  %s1 = inlined_call_operand.vmem [shape: f32[8,8], index: 1, kind: input, shape index: {}]
  %s2 = inlined_call_operand.vmem [shape: f32[1,8], index: 2, kind: input, shape index: {}]
  %s3 = inlined_call_operand.vmem [shape: f32[128,8], index: 3, kind: output, shape index: {}]
  %s4 = sld [smem:[#allocation0]]
  $region45: #{lm_head.1} parent=0
    _
  %s6 = ssub.s32 1, %s4
  %s7 = scalar_select 0, %s6, %s4
  loop: start=0, step=1, limit=6
  $region2: #{lm_head.1} parent=0 // loop_pre_header
    _
  $region3: #{lm_head.1} parent=0 // loop_header
    %s9 = sphi 0, %s13
    %p10 = scmp.ge.s32.totalorder %s9, 6
    %s19 = sphi 0, %s21
    %s22 = sphi 0, %s19
    %s23 = sphi 0, %s22
    %s39 = sphi 0, %s23
    %s43 = sphi 0, %s43
    %s45 = sphi 0, %s43
    %s46 = sphi 0, %s45
    %s60 = sphi 0, %s46
    %s64 = sphi 0, %s64
    %s66 = sphi 0, %s64
    %s67 = sphi 0, %s66
    %s81 = sphi 0, %s67
    %s87 = sphi 0, %s89
    %s90 = sphi 0, %s87
    %s91 = sphi 0, %s90
    %s107 = sphi 0, %s91
  $region4: #{lm_head.1} parent=0 // loop_header_branch
    %12 = sbr.rel (%p10) target = $region8
  $region5: #{lm_head.1} parent=0 // loop_body
    %s14 = ssub.s32 %s9, 1
    %s15 = ssub.s32 %s9, 2
    %s16 = sadd.s32 %s9, 1
    %s17 = ssub.s32 %s9, %s16
    %p18 = scmp.eq.s32.totalorder %s17, 0
    %s20 = sadd.s32 %s19, 1
    %s21 = scalar_select %p18, %s19, %s20
    %p24 = pneg %p18
    %p25 = scmp.eq.s32.totalorder %s9, 3
    %p26 = por %p24, %p25
    %p27 = scmp.ne.s32.totalorder %s19, %s22
    %p28 = scmp.eq.s32.totalorder %s9, 0
    %p29 = por %p27, %p28
    %p30 = scmp.ne.s32.totalorder %s19, %s22
    %p31 = scmp.eq.s32.totalorder %s14, 3
    %p32 = por %p30, %p31
    %p33 = scmp.ne.s32.totalorder %s22, %s23
    %p34 = scmp.eq.s32.totalorder %s14, 0
    %p35 = por %p33, %p34
    %p36 = scmp.ne.s32.totalorder %s22, %s23
    %p37 = scmp.eq.s32.totalorder %s15, 3
    %p38 = por %p36, %p37
    %p40 = scmp.ne.s32.totalorder %s23, %s39
    %p41 = scmp.eq.s32.totalorder %s15, 0
    %p42 = por %p40, %p41
    %s44 = sadd.s32 %s43, 1
    %p47 = scmp.eq.s32.totalorder %s9, 3
    %p48 = scmp.ne.s32.totalorder %s43, %s45
    %p49 = scmp.eq.s32.totalorder %s9, 0
    %p50 = por %p48, %p49
    %p51 = scmp.ne.s32.totalorder %s43, %s45
    %p52 = scmp.eq.s32.totalorder %s14, 3
    %p53 = por %p51, %p52
    %p54 = scmp.ne.s32.totalorder %s45, %s46
    %p55 = scmp.eq.s32.totalorder %s14, 0
    %p56 = por %p54, %p55
    %p57 = scmp.ne.s32.totalorder %s45, %s46
    %p58 = scmp.eq.s32.totalorder %s15, 3
    %p59 = por %p57, %p58
    %p61 = scmp.ne.s32.totalorder %s46, %s60
    %p62 = scmp.eq.s32.totalorder %s15, 0
    %p63 = por %p61, %p62
    %s65 = sadd.s32 %s64, 1
    %p68 = scmp.eq.s32.totalorder %s9, 3
    %p69 = scmp.ne.s32.totalorder %s64, %s66
    %p70 = scmp.eq.s32.totalorder %s9, 0
    %p71 = por %p69, %p70
    %p72 = scmp.ne.s32.totalorder %s64, %s66
    %p73 = scmp.eq.s32.totalorder %s14, 3
    %p74 = por %p72, %p73
    %p75 = scmp.ne.s32.totalorder %s66, %s67
    %p76 = scmp.eq.s32.totalorder %s14, 0
    %p77 = por %p75, %p76
    %p78 = scmp.ne.s32.totalorder %s66, %s67
    %p79 = scmp.eq.s32.totalorder %s15, 3
    %p80 = por %p78, %p79
    %p82 = scmp.ne.s32.totalorder %s67, %s81
    %p83 = scmp.eq.s32.totalorder %s15, 0
    %p84 = por %p82, %p83
    %s85 = ssub.s32 %s9, %s16
    %p86 = scmp.eq.s32.totalorder %s85, 0
    %s88 = sadd.s32 %s87, 1
    %s89 = scalar_select %p86, %s87, %s88
    %p92 = pneg %p86
    %p93 = scmp.eq.s32.totalorder %s9, 3
    %p94 = por %p92, %p93
    %p95 = scmp.ne.s32.totalorder %s87, %s90
    %p96 = scmp.eq.s32.totalorder %s9, 0
    %p97 = por %p95, %p96
    %p98 = scmp.ne.s32.totalorder %s87, %s90
    %p99 = scmp.eq.s32.totalorder %s14, 3
    %p100 = por %p98, %p99
    %p101 = scmp.ne.s32.totalorder %s90, %s91
    %p102 = scmp.eq.s32.totalorder %s14, 0
    %p103 = por %p101, %p102
    %p104 = scmp.ne.s32.totalorder %s90, %s91
    %p105 = scmp.eq.s32.totalorder %s15, 3
    %p106 = por %p104, %p105
    %p108 = scmp.ne.s32.totalorder %s91, %s107
    %p109 = scmp.eq.s32.totalorder %s15, 0
    %p110 = por %p108, %p109
    %p111 = scmp.le.s32.totalorder 1, %s9
    %p112 = scmp.lt.s32.totalorder %s9, 5
    %p113 = pnand %p111, %p112
    %p114 = pneg %p113
    // Predicated region
    $region9: #{lm_head.1} parent=5 // pred_check
      _
    $region10: #{lm_head.1} parent=5 // pred_check_branch
      %116 = sbr.rel (%p113) target = $region12
    $region11: #{lm_head.1} parent=5 // pred_region
      %s117 = ssub.s32 %s9, 1
      // Predicated region
      $region13: #{lm_head.1} parent=11 // pred_check
        %p118 = pneg %p56
      $region14: #{lm_head.1} parent=11 // pred_check_branch
        %120 = sbr.rel (%p118) target = $region16
      $region15: #{lm_head.1} parent=11 // pred_region
        _
      $region16: #{lm_head.1} parent=11 // pred_fallthru
        _
      // Predicated region
      $region17: #{lm_head.1} parent=11 // pred_check
        %p121 = pneg %p77
      $region18: #{lm_head.1} parent=11 // pred_check_branch
        %123 = sbr.rel (%p121) target = $region20
      $region19: #{lm_head.1} parent=11 // pred_region
        _
      $region20: #{lm_head.1} parent=11 // pred_fallthru
        _
    $region12: #{lm_head.1} parent=5 // pred_fallthru
      _
    %p124 = scmp.lt.s32.totalorder %s9, 4
    // Predicated region
    $region21: #{lm_head.1} parent=5 // pred_check
      %p125 = pneg %p124
    $region22: #{lm_head.1} parent=5 // pred_check_branch
      %127 = sbr.rel (%p125) target = $region24
    $region23: #{lm_head.1} parent=5 // pred_region
      // Predicated region
      $region25: #{lm_head.1} parent=23 // pred_check
        %p128 = pneg %p29
      $region26: #{lm_head.1} parent=23 // pred_check_branch
        %130 = sbr.rel (%p128) target = $region28
      $region27: #{lm_head.1} parent=23 // pred_region
        %s131 = smul.u32 4, %s9
        %p132 = scmp.lt.s32.totalorder %s131, 15
        %s133 = scalar_select %p132, %s131, 15
        %s134 = smul.addr %s133, 8
        %s135 = scalar_lea.vmem %s0, %s134
        %s136 = smul.u32 4, %s9
      $region28: #{lm_head.1} parent=23 // pred_fallthru
        _
    $region24: #{lm_head.1} parent=5 // pred_fallthru
      _
    %p137 = scmp.le.s32.totalorder 1, %s9
    %p138 = scmp.lt.s32.totalorder %s9, 5
    %p139 = pnand %p137, %p138
    %p140 = pneg %p139
    // Predicated region
    $region29: #{lm_head.1} parent=5 // pred_check
      _
    $region30: #{lm_head.1} parent=5 // pred_check_branch
      %142 = sbr.rel (%p139) target = $region32
    $region31: #{lm_head.1} parent=5 // pred_region
      %s143 = ssub.s32 %s9, 1
      %s144 = smul.u32 4, %s14
      %p145 = scmp.lt.s32.totalorder %s144, 15
      %s146 = scalar_select %p145, %s144, 15
      %s147 = smul.addr %s146, 8
      %s148 = scalar_lea.vmem %s0, %s147
      %p149 = pneg %p35
      %p150 = pneg %p32
      %p151 = pneg %p56
      %p152 = pneg %p53
      %p153 = pneg %p77
      %p154 = pneg %p74
      %p155 = pneg %p103
      %p156 = pneg %p100
      %s157 = smul.u32 4, %s14
      %p158 = scmp.lt.s32.totalorder %s157, 15
      %s159 = scalar_select %p158, %s157, 15
      %s160 = smul.addr %s159, 8
      %s161 = scalar_lea.vmem %s3, %s160
      %s162 = smul.u32 4, %s14
      %p163 = scmp.lt.s32.totalorder %s162, 15
      %s164 = scalar_select %p163, %s162, 15
      %s165 = smul.addr %s164, 8
      %s166 = scalar_lea.vmem %s0, %s165
      %s167 = smul.u32 4, %s14
      %s168 = smul.u32 4, %s14
      %p169 = scmp.lt.s32.totalorder %s168, 15
      %s170 = scalar_select %p169, %s168, 15
      %s171 = smul.addr %s170, 8
      %s172 = scalar_lea.vmem %s3, %s171
      %s173 = smul.u32 4, %s14
      %v174 = vld [vmem:[%s166] sm:$0xff]
      %v175 = vld [vmem:[%s166 + $0x8] sm:$0xff]
      %v176 = vld [vmem:[%s166 + $0x10] sm:$0xff]
      %v177 = vld [vmem:[%s166 + $0x18] sm:$0xff]
      %v178 = vld [vmem:[%s1] sm:$0xff]
      %v179 = vld [vmem:[%s2] sm:$0x1]
      %v181 = vlaneseq
      %v182 = vshrl.u32 %v181, 7
      %v183 = vsub.s32 0, %v182
      %v184 = vrot.slane %v179, %v183
      %vm186 = vcmask 64512
      %v188 = vsel %vm186, %v174, 0
      %v191 = vsel %vm186, %v175, 0
      %v194 = vsel %vm186, %v176, 0
      %v197 = vsel %vm186, %v177, 0
      %v200 = vsel %vm186, %v178, 0
      %202 = vmatprep.subr.mxu0 0.0
      %203 = vmatpush1.xpose.msra.mxu0 %v200
      %204 = vmatprep.subr.mxu0 0.0
      %205 = vmatpush1.xpose.msra.mxu0 0.0
      %206 = vmatprep.subr.mxu0 0.0
      %207 = vmatpush1.xpose.msra.mxu0 0.0
      %208 = vmatprep.subr.mxu0 0.0
      %209 = vmatpush1.xpose.msra.mxu0 0.0
      %210 = vmatprep.subr.mxu0 0.0
      %211 = vmatpush1.xpose.msra.mxu0 0.0
      %212 = vmatprep.subr.mxu0 0.0
      %213 = vmatpush1.xpose.msra.mxu0 0.0
      %214 = vmatprep.subr.mxu0 0.0
      %215 = vmatpush1.xpose.msra.mxu0 0.0
      %216 = vmatprep.subr.mxu0 0.0
      %217 = vmatpush1.xpose.msra.mxu0 0.0
      %218 = vmatprep.subr.mxu0 0.0
      %219 = vmatpush1.xpose.msra.mxu0 0.0
      %220 = vmatprep.subr.mxu0 0.0
      %221 = vmatpush1.xpose.msra.mxu0 0.0
      %222 = vmatprep.subr.mxu0 0.0
      %223 = vmatpush1.xpose.msra.mxu0 0.0
      %224 = vmatprep.subr.mxu0 0.0
      %225 = vmatpush1.xpose.msra.mxu0 0.0
      %226 = vmatprep.subr.mxu0 0.0
      %227 = vmatpush1.xpose.msra.mxu0 0.0
      %228 = vmatprep.subr.mxu0 0.0
      %229 = vmatpush1.xpose.msra.mxu0 0.0
      %230 = vmatprep.subr.mxu0 0.0
      %231 = vmatpush1.xpose.msra.mxu0 0.0
      %232 = vmatprep.subr.mxu0 0.0
      %233 = vmatpush1.xpose.msra.mxu0 0.0
      %234 = vmatprep.subr.mxu0 0.0
      %235 = vmatpush1.xpose.msra.mxu0 0.0
      %236 = vmatprep.subr.mxu0 0.0
      %237 = vmatpush1.xpose.msra.mxu0 0.0
      %238 = vmatprep.subr.mxu0 0.0
      %239 = vmatpush1.xpose.msra.mxu0 0.0
      %240 = vmatprep.subr.mxu0 0.0
      %241 = vmatpush1.xpose.msra.mxu0 0.0
      %242 = vmatprep.subr.mxu0 0.0
      %243 = vmatpush1.xpose.msra.mxu0 0.0
      %244 = vmatprep.subr.mxu0 0.0
      %245 = vmatpush1.xpose.msra.mxu0 0.0
      %246 = vmatprep.subr.mxu0 0.0
      %247 = vmatpush1.xpose.msra.mxu0 0.0
      %248 = vmatprep.subr.mxu0 0.0
      %249 = vmatpush1.xpose.msra.mxu0 0.0
      %250 = vmatprep.subr.mxu0 0.0
      %251 = vmatpush1.xpose.msra.mxu0 0.0
      %252 = vmatprep.subr.mxu0 0.0
      %253 = vmatpush1.xpose.msra.mxu0 0.0
      %254 = vmatprep.subr.mxu0 0.0
      %255 = vmatpush1.xpose.msra.mxu0 0.0
      %256 = vmatprep.subr.mxu0 0.0
      %257 = vmatpush1.xpose.msra.mxu0 0.0
      %258 = vmatprep.subr.mxu0 0.0
      %259 = vmatpush1.xpose.msra.mxu0 0.0
      %260 = vmatprep.subr.mxu0 0.0
      %261 = vmatpush1.xpose.msra.mxu0 0.0
      %262 = vmatprep.subr.mxu0 0.0
      %263 = vmatpush1.xpose.msra.mxu0 0.0
      %264 = vmatprep.subr.mxu0 0.0
      %265 = vmatpush1.xpose.msra.mxu0 0.0
      %266 = vmatprep.mubr.f32.mxu0 0.0
      %267 = vmatmul.mubr.f32.gmra.mrb[0].mxu0 %v188
      %v268 = vpop.f32.mrb[0].mxu0
      %v269 = vadd.f32 %v184, %v268
      %v270 = vpop.f32.mrb[0].mxu0
      %271 = vmatprep.mubr.f32.mxu0 0.0
      %272 = vmatmul.mubr.f32.gmra.mrb[0].mxu0 %v191
      %v273 = vpop.f32.mrb[0].mxu0
      %v274 = vadd.f32 %v184, %v273
      %v275 = vpop.f32.mrb[0].mxu0
      %276 = vmatprep.mubr.f32.mxu0 0.0
      %277 = vmatmul.mubr.f32.gmra.mrb[0].mxu0 %v194
      %v278 = vpop.f32.mrb[0].mxu0
      %v279 = vadd.f32 %v184, %v278
      %v280 = vpop.f32.mrb[0].mxu0
      %281 = vmatprep.mubr.f32.mxu0 0.0
      %282 = vmatmul.mubr.f32.gmra.mrb[0].mxu0 %v197
      %v283 = vpop.f32.mrb[0].mxu0
      %v284 = vadd.f32 %v184, %v283
      %v285 = vpop.f32.mrb[0].mxu0
      %286 = vdwg.mxu0
      %287 = vst.msk [vmem:[%s172] sm:$0xff] %vm186, %v269
      %288 = vst.msk [vmem:[%s172 + $0x8] sm:$0xff] %vm186, %v274
      %289 = vst.msk [vmem:[%s172 + $0x10] sm:$0xff] %vm186, %v279
      %290 = vst.msk [vmem:[%s172 + $0x18] sm:$0xff] %vm186, %v284
      %s291 = smul.u32 4, %s14
      %p292 = scmp.lt.s32.totalorder %s291, 15
      %s293 = scalar_select %p292, %s291, 15
      %s294 = smul.addr %s293, 8
      %s295 = scalar_lea.vmem %s3, %s294
      // Predicated region
      $region33: #{lm_head.1} parent=31 // pred_check
        %p296 = pneg %p100
      $region34: #{lm_head.1} parent=31 // pred_check_branch
        %298 = sbr.rel (%p296) target = $region36
      $region35: #{lm_head.1} parent=31 // pred_region
        %s299 = smul.u32 4, %s14
      $region36: #{lm_head.1} parent=31 // pred_fallthru
        _
    $region32: #{lm_head.1} parent=5 // pred_fallthru
      _
    %p300 = scmp.le.s32.totalorder 2, %s9
    // Predicated region
    $region37: #{lm_head.1} parent=5 // pred_check
      %p301 = pneg %p300
    $region38: #{lm_head.1} parent=5 // pred_check_branch
      %303 = sbr.rel (%p301) target = $region40
    $region39: #{lm_head.1} parent=5 // pred_region
      %s304 = ssub.s32 %s9, 2
      // Predicated region
      $region41: #{lm_head.1} parent=39 // pred_check
        %p305 = pneg %p106
      $region42: #{lm_head.1} parent=39 // pred_check_branch
        %307 = sbr.rel (%p305) target = $region44
      $region43: #{lm_head.1} parent=39 // pred_region
        %s308 = smul.u32 4, %s15
        %p309 = scmp.lt.s32.totalorder %s308, 15
        %s310 = scalar_select %p309, %s308, 15
        %s311 = smul.addr %s310, 8
        %s312 = scalar_lea.vmem %s3, %s311
      $region44: #{lm_head.1} parent=39 // pred_fallthru
        _
    $region40: #{lm_head.1} parent=5 // pred_fallthru
      _
  $region6: #{lm_head.1} parent=0 // loop_footer
    %s13 = sadd.s32 1, %s9
  $region7: #{lm_head.1} parent=0 // loop_footer_branch
    %8 = sbr.rel target = $region3
  $region8: #{lm_head.1} parent=0 // loop_exit
    _

</llo_original>
